<compile_context>
chip_gen: v5e
topology: v5e:2x2
jax: 0.10.0
libtpu: 0.0.40
codegen_flags: <defaults>
</compile_context>

<pallas_src>
from functools import partial

import jax
import jax.numpy as jnp
from jax.experimental import pallas as pl
from jax.experimental.pallas import tpu as pltpu

BN_EPS = 1e-5
LEAKY_SLOPE = 0.1


def _vmem_capacity_bytes():
    """Physical VMEM capacity (per core); conservative fallback if unavailable."""
    try:
        return int(pltpu.get_tpu_info().vmem_capacity_bytes)
    except Exception:
        return 64 << 20  # v7x per-TC VMEM -- the smallest of v5e/v6e/v7x


def _bn_scale_shift(col_sum, col_sumsq, gamma, beta, n_rows):
    """Fold training-mode BatchNorm1d into per-feature scale/shift.

    col_sum / col_sumsq are (1, D) column sums of h and h*h over the FULL batch
    of `n_rows` rows.  Returns (scale, shift), each (1, D): y = h*scale + shift.
    """
    inv_n = 1.0 / n_rows
    mu = col_sum * inv_n
    # One-pass biased variance; clamp tiny negative values from cancellation.
    var = jnp.maximum(col_sumsq * inv_n - mu * mu, 0.0)
    scale = gamma * jax.lax.rsqrt(var + BN_EPS)
    shift = beta - mu * scale
    return scale, shift


def _leaky_relu(y):
    # slope < 1  =>  max(y, slope*y) == LeakyReLU(slope)(y)
    return jnp.maximum(y, LEAKY_SLOPE * y)


# ---------------------------------------------------------------------------
# Small/medium-batch path: whole batch resident in VMEM, single fused kernel.
# HBM traffic: read x once, write out once.
# ---------------------------------------------------------------------------
def _fused_kernel(x_ref, w1_ref, g1_ref, b1_ref, w2_ref, g2_ref, b2_ref, o_ref):
    x = x_ref[...]
    n_rows = x.shape[0]

    # module 1: Linear -> BN -> LeakyReLU(0.1), residual
    h = jnp.dot(x, w1_ref[...], preferred_element_type=jnp.float32)
    s = jnp.sum(h, axis=0, keepdims=True)
    sq = jnp.sum(h * h, axis=0, keepdims=True)
    scale, shift = _bn_scale_shift(s, sq, g1_ref[...], b1_ref[...], n_rows)
    x = _leaky_relu(h * scale + shift) + x

    # module 2: Linear -> BN -> Tanh, residual
    h = jnp.dot(x, w2_ref[...], preferred_element_type=jnp.float32)
    s = jnp.sum(h, axis=0, keepdims=True)
    sq = jnp.sum(h * h, axis=0, keepdims=True)
    scale, shift = _bn_scale_shift(s, sq, g2_ref[...], b2_ref[...], n_rows)
    o_ref[...] = (jnp.tanh(h * scale + shift) + x).astype(o_ref.dtype)


@jax.jit
def _generator_fused(x, w1, g1, b1, w2, g2, b2):
    B, D = x.shape
    vmem = pl.BlockSpec(memory_space=pltpu.MemorySpace.VMEM)
    vmem_limit = _vmem_capacity_bytes() * 3 // 4   # raise scoped default, keep headroom
    return pl.pallas_call(
        _fused_kernel,
        out_shape=jax.ShapeDtypeStruct((B, D), x.dtype),
        in_specs=[vmem] * 7,
        out_specs=vmem,
        compiler_params=pltpu.CompilerParams(vmem_limit_bytes=vmem_limit),
    )(x, w1, g1, b1, w2, g2, b2)


# ---------------------------------------------------------------------------
# Large-batch path: ONE pallas_call, grid = (3 passes, n_tiles), exact
# full-batch BN stats, no HBM intermediates (everything recomputed from x).
#   pass 0: h1 = x@W1, accumulate sum/sumsq(h1)        -> scale1/shift1 (VMEM)
#   pass 1: recompute h1 -> x1, h2 = x1@W2, stats(h2)  -> scale2/shift2 (VMEM)
#   pass 2: recompute h1 -> x1 -> h2, BN2 + tanh + residual, write out
# ---------------------------------------------------------------------------
def _pipeline_kernel(x_ref, w1_ref, g1_ref, b1_ref, w2_ref, g2_ref, b2_ref,
                     o_ref, acc_ref, ss1_ref, ss2_ref, *, n_rows):
    p = pl.program_id(0)          # pass index (0, 1, 2)
    i = pl.program_id(1)          # batch-tile index
    last = pl.num_programs(1) - 1

    # Reset the running sum/sumsq at the start of each stats pass.
    @pl.when((p < 2) & (i == 0))
    def _():
        acc_ref[...] = jnp.zeros_like(acc_ref)

    x = x_ref[...]

    def compute_x1(xv):
        h1 = jnp.dot(xv, w1_ref[...], preferred_element_type=jnp.float32)
        return _leaky_relu(h1 * ss1_ref[0:1, :] + ss1_ref[1:2, :]) + xv

    # ---- pass 0: BN1 statistics over h1 --------------------------------
    @pl.when(p == 0)
    def _():
        h1 = jnp.dot(x, w1_ref[...], preferred_element_type=jnp.float32)
        acc_ref[0:1, :] += jnp.sum(h1, axis=0, keepdims=True)
        acc_ref[1:2, :] += jnp.sum(h1 * h1, axis=0, keepdims=True)

        @pl.when(i == last)
        def _():
            scale, shift = _bn_scale_shift(acc_ref[0:1, :], acc_ref[1:2, :],
                                           g1_ref[...], b1_ref[...], n_rows)
            ss1_ref[0:1, :] = scale
            ss1_ref[1:2, :] = shift

    # ---- pass 1: apply BN1 (recomputed h1), BN2 statistics over h2 -----
    @pl.when(p == 1)
    def _():
        x1 = compute_x1(x)
        h2 = jnp.dot(x1, w2_ref[...], preferred_element_type=jnp.float32)
        acc_ref[0:1, :] += jnp.sum(h2, axis=0, keepdims=True)
        acc_ref[1:2, :] += jnp.sum(h2 * h2, axis=0, keepdims=True)

        @pl.when(i == last)
        def _():
            scale, shift = _bn_scale_shift(acc_ref[0:1, :], acc_ref[1:2, :],
                                           g2_ref[...], b2_ref[...], n_rows)
            ss2_ref[0:1, :] = scale
            ss2_ref[1:2, :] = shift

    # ---- pass 2: recompute h1 -> x1 -> h2, BN2 + tanh + residual, write -
    @pl.when(p == 2)
    def _():
        x1 = compute_x1(x)
        h2 = jnp.dot(x1, w2_ref[...], preferred_element_type=jnp.float32)
        o_ref[...] = (jnp.tanh(h2 * ss2_ref[0:1, :] + ss2_ref[1:2, :])
                      + x1).astype(o_ref.dtype)


@partial(jax.jit, static_argnames=("block_b",))
def _generator_tiled(x, w1, g1, b1, w2, g2, b2, *, block_b):
    B, D = x.shape
    n_tiles = B // block_b
    f32 = jnp.float32

    # Streamed activation tile (depends only on the tile index).
    act_spec = pl.BlockSpec((block_b, D), lambda p, i: (i, 0))
    # Output stays pinned to block (0,0) during passes 0/1 (no writebacks);
    # only pass 2 walks the batch and produces real writebacks.
    out_spec = pl.BlockSpec((block_b, D), lambda p, i: (jnp.where(p == 2, i, 0), 0))
    # Weights / BN affine params: constant index map -> VMEM-resident, DMA'd once.
    wt_spec = pl.BlockSpec((D, D), lambda p, i: (0, 0))
    vec_spec = pl.BlockSpec((1, D), lambda p, i: (0, 0))

    return pl.pallas_call(
        partial(_pipeline_kernel, n_rows=B),
        grid=(3, n_tiles),
        in_specs=[act_spec, wt_spec, vec_spec, vec_spec, wt_spec, vec_spec, vec_spec],
        out_specs=out_spec,
        out_shape=jax.ShapeDtypeStruct((B, D), x.dtype),
        scratch_shapes=[pltpu.VMEM((2, D), f32),   # acc: [sum; sumsq] of current layer
                        pltpu.VMEM((2, D), f32),   # ss1: [scale1; shift1]
                        pltpu.VMEM((2, D), f32)],  # ss2: [scale2; shift2]
        compiler_params=pltpu.CompilerParams(
            dimension_semantics=("arbitrary", "arbitrary"),
            vmem_limit_bytes=_vmem_capacity_bytes() * 3 // 4),
    )(x, w1, g1, b1, w2, g2, b2)


def generator_forward(x, w1, g1, b1, w2, g2, b2, block_b=1024):
    """fairgan Generator forward pass (training-mode BatchNorm semantics)."""
    B, D = x.shape
    # Fused whole-batch kernel moves 4.5x less HBM data than any tiled scheme
    # and needs only ~6 activation-sized live buffers, so use it whenever the
    # batch comfortably fits the (raised) scoped-VMEM budget.
    vmem_budget = _vmem_capacity_bytes() * 3 // 8        # ~half the raised limit
    fused_live_bytes = 6 * B * D * 4 + 2 * D * D * 4
    if fused_live_bytes <= vmem_budget or B % 8 != 0:
        return _generator_fused(x, w1, g1, b1, w2, g2, b2)

    # Pick the largest tile <= block_b that divides B (keeps full-batch BN exact).
    bb = min(block_b, B)
    while bb >= 8 and B % bb != 0:
        bb //= 2
    if bb < 8:
        return _generator_fused(x, w1, g1, b1, w2, g2, b2)
    return _generator_tiled(x, w1, g1, b1, w2, g2, b2, block_b=bb)


def generator_forward_ref(x, w1, g1, b1, w2, g2, b2):
    """Pure-JAX reference (matches PyTorch training-mode forward)."""
    def bn(h, g, b):
        mu = jnp.mean(h, axis=0, keepdims=True)
        var = jnp.mean((h - mu) ** 2, axis=0, keepdims=True)   # biased variance
        return g * (h - mu) / jnp.sqrt(var + BN_EPS) + b

    h = x @ w1
    y = bn(h, g1, b1)
    y = jnp.where(y >= 0.0, y, LEAKY_SLOPE * y)
    x = y + x
    y = jnp.tanh(bn(x @ w2, g2, b2))
    return y + x


if __name__ == "__main__":
    D = 128    # latent_size == layer_sizes[-1]; required by the residual adds.

    key = jax.random.PRNGKey(0)
    kx1, kx2, kw1, kw2, kg1, kb1, kg2, kb2 = jax.random.split(key, 8)

    bound = 1.0 / (D ** 0.5)
    w1 = jax.random.uniform(kw1, (D, D), jnp.float32, -bound, bound)  # (in, out): kernel does x @ W
    w2 = jax.random.uniform(kw2, (D, D), jnp.float32, -bound, bound)
    g1 = jax.random.uniform(kg1, (1, D), jnp.float32, 0.5, 1.5)       # BN affine params
    b1 = 0.1 * jax.random.normal(kb1, (1, D), jnp.float32)
    g2 = jax.random.uniform(kg2, (1, D), jnp.float32, 0.5, 1.5)
    b2 = 0.1 * jax.random.normal(kb2, (1, D), jnp.float32)

    # Case 1: small batch via the dispatcher -> single fused whole-batch kernel.
    x_small = jax.random.normal(kx1, (8, D), jnp.float32)
    ref_small = generator_forward_ref(x_small, w1, g1, b1, w2, g2, b2)
    out_small = jax.block_until_ready(
        generator_forward(x_small, w1, g1, b1, w2, g2, b2))
    assert out_small.shape == (8, D)
    assert jnp.allclose(out_small, ref_small, atol=1e-4, rtol=1e-4), \
        "fused path mismatch vs. JAX reference"

    # Case 2: exercise the batch-tiled single-kernel 3-pass pipeline directly
    # (grid = (3 passes, 4 tiles of 16 rows)); BatchNorm statistics must remain
    # exact over the FULL batch despite the tiling and the recompute scheme.
    x_big = jax.random.normal(kx2, (64, D), jnp.float32)
    ref_big = generator_forward_ref(x_big, w1, g1, b1, w2, g2, b2)
    out_big = jax.block_until_ready(
        _generator_tiled(x_big, w1, g1, b1, w2, g2, b2, block_b=16))
    assert out_big.shape == (64, D)
    assert jnp.allclose(out_big, ref_big, atol=1e-4, rtol=1e-4), \
        "tiled path mismatch vs. JAX reference"

    print("KERNEL_OK")
</pallas_src>

<mosaic_0001>
module attributes {stable_mosaic.version = 11 : i64} {
  func.func @_fused_kernel(%arg0: memref<8x128xf32, #tpu.memory_space<vmem>>, %arg1: memref<128x128xf32, #tpu.memory_space<vmem>>, %arg2: memref<1x128xf32, #tpu.memory_space<vmem>>, %arg3: memref<1x128xf32, #tpu.memory_space<vmem>>, %arg4: memref<128x128xf32, #tpu.memory_space<vmem>>, %arg5: memref<1x128xf32, #tpu.memory_space<vmem>>, %arg6: memref<1x128xf32, #tpu.memory_space<vmem>>, %arg7: memref<8x128xf32, #tpu.memory_space<vmem>>) attributes {dimension_semantics = [], scalar_prefetch = 0 : i64, scratch_operands = 0 : i64, tpu.core_type = #tpu.core_type<tc>} {
    %c0 = arith.constant 0 : index
    %c0_0 = arith.constant 0 : index
    %0 = vector.load %arg0[%c0, %c0_0] : memref<8x128xf32, #tpu.memory_space<vmem>>, vector<8x128xf32>
    %c0_1 = arith.constant 0 : index
    %c0_2 = arith.constant 0 : index
    %1 = vector.load %arg1[%c0_1, %c0_2] : memref<128x128xf32, #tpu.memory_space<vmem>>, vector<128x128xf32>
    %cst = arith.constant dense<0.000000e+00> : vector<8x128xf32>
    %2 = tpu.matmul %0, %1, %cst {dimension_numbers = #tpu.dot_dimension_numbers<[1], [0], [0], [1], [0, 0, 1, 1], [], []>} : vector<8x128xf32>, vector<128x128xf32>, vector<8x128xf32> -> vector<8x128xf32>
    %cst_3 = arith.constant dense<0.000000e+00> : vector<128xf32>
    %3 = vector.multi_reduction <add>, %2, %cst_3 [0] : vector<8x128xf32> to vector<128xf32>
    %4 = vector.shape_cast %3 : vector<128xf32> to vector<1x128xf32>
    %5 = arith.mulf %2, %2 : vector<8x128xf32>
    %cst_4 = arith.constant dense<0.000000e+00> : vector<128xf32>
    %6 = vector.multi_reduction <add>, %5, %cst_4 [0] : vector<8x128xf32> to vector<128xf32>
    %7 = vector.shape_cast %6 : vector<128xf32> to vector<1x128xf32>
    %c0_5 = arith.constant 0 : index
    %c0_6 = arith.constant 0 : index
    %8 = vector.load %arg2[%c0_5, %c0_6] : memref<1x128xf32, #tpu.memory_space<vmem>>, vector<1x128xf32>
    %c0_7 = arith.constant 0 : index
    %c0_8 = arith.constant 0 : index
    %9 = vector.load %arg3[%c0_7, %c0_8] : memref<1x128xf32, #tpu.memory_space<vmem>>, vector<1x128xf32>
    %cst_9 = arith.constant 1.250000e-01 : f32
    %10 = vector.broadcast %cst_9 : f32 to vector<1x128xf32>
    %11 = arith.mulf %4, %10 : vector<1x128xf32>
    %cst_10 = arith.constant 1.250000e-01 : f32
    %12 = vector.broadcast %cst_10 : f32 to vector<1x128xf32>
    %13 = arith.mulf %7, %12 : vector<1x128xf32>
    %14 = arith.mulf %11, %11 : vector<1x128xf32>
    %15 = arith.subf %13, %14 : vector<1x128xf32>
    %cst_11 = arith.constant 0.000000e+00 : f32
    %16 = vector.broadcast %cst_11 : f32 to vector<1x128xf32>
    %17 = arith.maximumf %15, %16 : vector<1x128xf32>
    %cst_12 = arith.constant 9.99999974E-6 : f32
    %18 = vector.broadcast %cst_12 : f32 to vector<1x128xf32>
    %19 = arith.addf %17, %18 : vector<1x128xf32>
    %20 = math.rsqrt %19 : vector<1x128xf32>
    %21 = arith.mulf %8, %20 : vector<1x128xf32>
    %22 = arith.mulf %11, %21 : vector<1x128xf32>
    %23 = arith.subf %9, %22 : vector<1x128xf32>
    %24 = vector.broadcast %21 : vector<1x128xf32> to vector<8x128xf32>
    %25 = arith.mulf %2, %24 : vector<8x128xf32>
    %26 = vector.broadcast %23 : vector<1x128xf32> to vector<8x128xf32>
    %27 = arith.addf %25, %26 : vector<8x128xf32>
    %cst_13 = arith.constant 1.000000e-01 : f32
    %28 = vector.broadcast %cst_13 : f32 to vector<8x128xf32>
    %29 = arith.mulf %28, %27 : vector<8x128xf32>
    %30 = arith.maximumf %27, %29 : vector<8x128xf32>
    %31 = arith.addf %30, %0 : vector<8x128xf32>
    %c0_14 = arith.constant 0 : index
    %c0_15 = arith.constant 0 : index
    %32 = vector.load %arg4[%c0_14, %c0_15] : memref<128x128xf32, #tpu.memory_space<vmem>>, vector<128x128xf32>
    %cst_16 = arith.constant dense<0.000000e+00> : vector<8x128xf32>
    %33 = tpu.matmul %31, %32, %cst_16 {dimension_numbers = #tpu.dot_dimension_numbers<[1], [0], [0], [1], [0, 0, 1, 1], [], []>} : vector<8x128xf32>, vector<128x128xf32>, vector<8x128xf32> -> vector<8x128xf32>
    %cst_17 = arith.constant dense<0.000000e+00> : vector<128xf32>
    %34 = vector.multi_reduction <add>, %33, %cst_17 [0] : vector<8x128xf32> to vector<128xf32>
    %35 = vector.shape_cast %34 : vector<128xf32> to vector<1x128xf32>
    %36 = arith.mulf %33, %33 : vector<8x128xf32>
    %cst_18 = arith.constant dense<0.000000e+00> : vector<128xf32>
    %37 = vector.multi_reduction <add>, %36, %cst_18 [0] : vector<8x128xf32> to vector<128xf32>
    %38 = vector.shape_cast %37 : vector<128xf32> to vector<1x128xf32>
    %c0_19 = arith.constant 0 : index
    %c0_20 = arith.constant 0 : index
    %39 = vector.load %arg5[%c0_19, %c0_20] : memref<1x128xf32, #tpu.memory_space<vmem>>, vector<1x128xf32>
    %c0_21 = arith.constant 0 : index
    %c0_22 = arith.constant 0 : index
    %40 = vector.load %arg6[%c0_21, %c0_22] : memref<1x128xf32, #tpu.memory_space<vmem>>, vector<1x128xf32>
    %cst_23 = arith.constant 1.250000e-01 : f32
    %41 = vector.broadcast %cst_23 : f32 to vector<1x128xf32>
    %42 = arith.mulf %35, %41 : vector<1x128xf32>
    %cst_24 = arith.constant 1.250000e-01 : f32
    %43 = vector.broadcast %cst_24 : f32 to vector<1x128xf32>
    %44 = arith.mulf %38, %43 : vector<1x128xf32>
    %45 = arith.mulf %42, %42 : vector<1x128xf32>
    %46 = arith.subf %44, %45 : vector<1x128xf32>
    %cst_25 = arith.constant 0.000000e+00 : f32
    %47 = vector.broadcast %cst_25 : f32 to vector<1x128xf32>
    %48 = arith.maximumf %46, %47 : vector<1x128xf32>
    %cst_26 = arith.constant 9.99999974E-6 : f32
    %49 = vector.broadcast %cst_26 : f32 to vector<1x128xf32>
    %50 = arith.addf %48, %49 : vector<1x128xf32>
    %51 = math.rsqrt %50 : vector<1x128xf32>
    %52 = arith.mulf %39, %51 : vector<1x128xf32>
    %53 = arith.mulf %42, %52 : vector<1x128xf32>
    %54 = arith.subf %40, %53 : vector<1x128xf32>
    %55 = vector.broadcast %52 : vector<1x128xf32> to vector<8x128xf32>
    %56 = arith.mulf %33, %55 : vector<8x128xf32>
    %57 = vector.broadcast %54 : vector<1x128xf32> to vector<8x128xf32>
    %58 = arith.addf %56, %57 : vector<8x128xf32>
    %59 = math.tanh %58 : vector<8x128xf32>
    %60 = arith.addf %59, %31 : vector<8x128xf32>
    %c0_27 = arith.constant 0 : index
    %c0_28 = arith.constant 0 : index
    %61 = vector.load %arg7[%c0_27, %c0_28] : memref<8x128xf32, #tpu.memory_space<vmem>>, vector<8x128xf32>
    tpu.vector_store %arg7[%c0_27, %c0_28], %60 {strides = array<i32>} : memref<8x128xf32, #tpu.memory_space<vmem>>, vector<8x128xf32>,
    return
  }
}

</mosaic_0001>

<llo_original>
// kernel: _generator_fused.1
$region0: #{_generator_fused.1}
  #allocation0 [shape = 'u32[]', space=smem, size = 0x4, offset = 0x4, fixed_abs, tag = 'smem constant byte address 0x4 - core index']
  #allocation1 [shape = 'u32[72,128]{1,0:T(1,128)}', space=vmem, size = 0x9000, scoped, tag = 'internal scratch']
  %s0 = inlined_call_operand.hbm [shape: f32[8,128], index: 0, kind: input, shape index: {}]
  %s1 = inlined_call_operand.hbm [shape: f32[128,128], index: 1, kind: input, shape index: {}]
  %s2 = inlined_call_operand.vmem [shape: f32[1,128], index: 2, kind: input, shape index: {}]
  %s3 = inlined_call_operand.vmem [shape: f32[1,128], index: 3, kind: input, shape index: {}]
  %s4 = inlined_call_operand.hbm [shape: f32[128,128], index: 4, kind: input, shape index: {}]
  %s5 = inlined_call_operand.vmem [shape: f32[1,128], index: 5, kind: input, shape index: {}]
  %s6 = inlined_call_operand.vmem [shape: f32[1,128], index: 6, kind: input, shape index: {}]
  %s7 = inlined_call_operand.hbm [shape: f32[8,128], index: 7, kind: output, shape index: {}]
  %s8 = sld [smem:[#allocation0]]
  $region50: #{_generator_fused.1} parent=0
    _
  %s10 = ssub.s32 1, %s8
  %s11 = scalar_select 0, %s10, %s8
  $region1: #{_generator_fused.1} parent=0
    #allocation2 [shape = 'u8[4096]{0}', space=vmem, size = 0x1000, scoped, tag = 'input window, operand 0, single buffered']
    #allocation3 [shape = 's32[1]{0}', space=sflag, size = 0x4, scoped, tag = 'scoped memory for _generator_fused.1']
    #allocation4 [shape = 's32[1]{0}', space=sflag, size = 0x4, scoped, tag = 'scoped memory for _generator_fused.1']
    #allocation5 [shape = 'u8[65536]{0}', space=vmem, size = 0x10000, scoped, tag = 'input window, operand 1, single buffered']
    #allocation6 [shape = 's32[1]{0}', space=sflag, size = 0x4, scoped, tag = 'scoped memory for _generator_fused.1']
    #allocation7 [shape = 'u8[65536]{0}', space=vmem, size = 0x10000, scoped, tag = 'input window, operand 4, single buffered']
    #allocation8 [shape = 'u8[4096]{0}', space=vmem, size = 0x1000, scoped, tag = 'output window, operand 0, single buffered']
    %12 = vsyncpa [#allocation3], 0
    %13 = vsyncpa [#allocation6], 0
    %14 = vsyncpa [#allocation4], 0
    // Predicated region
    $region2: #{_generator_fused.1} parent=1 // pred_check
      _
    $region3: #{_generator_fused.1} parent=1 // pred_check_branch
      %16 = sbr.rel (0) target = $region5
    $region4: #{_generator_fused.1} parent=1 // pred_region
      %18 = vsyncadd [#allocation3], 0
      %s20 = sshll.u32 %s0, 4
      %s21 = int_to_ptr.hbm [resolvable:$true] %s20
      %s22 = sshll.u32 [#allocation2], 4
      %s23 = int_to_ptr.vmem [resolvable:$true] %s22
      %25 = dma.hbm_to_vmem [thread:$0]  %s21, 128, %s23, [#allocation3]
    $region5: #{_generator_fused.1} parent=1 // pred_fallthru
      _
    // Predicated region
    $region6: #{_generator_fused.1} parent=1 // pred_check
      _
    $region7: #{_generator_fused.1} parent=1 // pred_check_branch
      %27 = sbr.rel (0) target = $region9
    $region8: #{_generator_fused.1} parent=1 // pred_region
      %29 = vsyncadd [#allocation6], 0
      %s30 = sshll.u32 %s1, 4
      %s31 = int_to_ptr.hbm [resolvable:$true] %s30
      %s32 = sshll.u32 [#allocation5], 4
      %s33 = int_to_ptr.vmem [resolvable:$true] %s32
      %38 = dma.hbm_to_vmem [thread:$0]  %s31, 2048, %s33, [#allocation6], 128, 128, 8
    $region9: #{_generator_fused.1} parent=1 // pred_fallthru
      _
    // Predicated region
    $region10: #{_generator_fused.1} parent=1 // pred_check
      _
    $region11: #{_generator_fused.1} parent=1 // pred_check_branch
      %40 = sbr.rel (0) target = $region13
    $region12: #{_generator_fused.1} parent=1 // pred_region
      _
    $region13: #{_generator_fused.1} parent=1 // pred_fallthru
      _
    // Predicated region
    $region14: #{_generator_fused.1} parent=1 // pred_check
      _
    $region15: #{_generator_fused.1} parent=1 // pred_check_branch
      %42 = sbr.rel (0) target = $region17
    $region16: #{_generator_fused.1} parent=1 // pred_region
      _
    $region17: #{_generator_fused.1} parent=1 // pred_fallthru
      _
    // Predicated region
    $region18: #{_generator_fused.1} parent=1 // pred_check
      _
    $region19: #{_generator_fused.1} parent=1 // pred_check_branch
      %44 = sbr.rel (0) target = $region21
    $region20: #{_generator_fused.1} parent=1 // pred_region
      %46 = vsyncadd [#allocation6], 0
      %s47 = sshll.u32 %s4, 4
      %s48 = int_to_ptr.hbm [resolvable:$true] %s47
      %s49 = sshll.u32 [#allocation7], 4
      %s50 = int_to_ptr.vmem [resolvable:$true] %s49
      %55 = dma.hbm_to_vmem [thread:$0]  %s48, 2048, %s50, [#allocation6], 128, 128, 8
    $region21: #{_generator_fused.1} parent=1 // pred_fallthru
      _
    // Predicated region
    $region22: #{_generator_fused.1} parent=1 // pred_check
      _
    $region23: #{_generator_fused.1} parent=1 // pred_check_branch
      %57 = sbr.rel (0) target = $region25
    $region24: #{_generator_fused.1} parent=1 // pred_region
      _
    $region25: #{_generator_fused.1} parent=1 // pred_fallthru
      _
    // Predicated region
    $region26: #{_generator_fused.1} parent=1 // pred_check
      _
    $region27: #{_generator_fused.1} parent=1 // pred_check_branch
      %59 = sbr.rel (0) target = $region29
    $region28: #{_generator_fused.1} parent=1 // pred_region
      _
    $region29: #{_generator_fused.1} parent=1 // pred_fallthru
      _
    // Predicated region
    $region30: #{_generator_fused.1} parent=1 // pred_check
      _
    $region31: #{_generator_fused.1} parent=1 // pred_check_branch
      %61 = sbr.rel (0) target = $region33
    $region32: #{_generator_fused.1} parent=1 // pred_region
      %63 = dma.done [#allocation3], 128
    $region33: #{_generator_fused.1} parent=1 // pred_fallthru
      _
    // Predicated region
    $region34: #{_generator_fused.1} parent=1 // pred_check
      _
    $region35: #{_generator_fused.1} parent=1 // pred_check_branch
      %65 = sbr.rel (0) target = $region37
    $region36: #{_generator_fused.1} parent=1 // pred_region
      %67 = dma.done [#allocation6], 2048
    $region37: #{_generator_fused.1} parent=1 // pred_fallthru
      _
    // Predicated region
    $region38: #{_generator_fused.1} parent=1 // pred_check
      _
    $region39: #{_generator_fused.1} parent=1 // pred_check_branch
      %69 = sbr.rel (0) target = $region41
    $region40: #{_generator_fused.1} parent=1 // pred_region
      %71 = dma.done [#allocation6], 2048
    $region41: #{_generator_fused.1} parent=1 // pred_fallthru
      _
    %v72 = vld [vmem:[#allocation2] sm:$0xff]
    %v73 = vld [vmem:[#allocation5] sm:$0xff]
    %v74 = vld [vmem:[#allocation5 + $0x8] sm:$0xff]
    %v75 = vld [vmem:[#allocation5 + $0x10] sm:$0xff]
    %v76 = vld [vmem:[#allocation5 + $0x18] sm:$0xff]
    %v77 = vld [vmem:[#allocation5 + $0x20] sm:$0xff]
    %v78 = vld [vmem:[#allocation5 + $0x28] sm:$0xff]
    %v79 = vld [vmem:[#allocation5 + $0x30] sm:$0xff]
    %v80 = vld [vmem:[#allocation5 + $0x38] sm:$0xff]
    %v81 = vld [vmem:[#allocation5 + $0x40] sm:$0xff]
    %v82 = vld [vmem:[#allocation5 + $0x48] sm:$0xff]
    %v83 = vld [vmem:[#allocation5 + $0x50] sm:$0xff]
    %v84 = vld [vmem:[#allocation5 + $0x58] sm:$0xff]
    %v85 = vld [vmem:[#allocation5 + $0x60] sm:$0xff]
    %v86 = vld [vmem:[#allocation5 + $0x68] sm:$0xff]
    %v87 = vld [vmem:[#allocation5 + $0x70] sm:$0xff]
    %v88 = vld [vmem:[#allocation5 + $0x78] sm:$0xff]
    %89 = vmatpush.msra.mxu0 %v88
    %90 = vmatpush.msra.mxu0 %v87
    %91 = vmatpush.msra.mxu0 %v86
    %92 = vmatpush.msra.mxu0 %v85
    %93 = vmatpush.msra.mxu0 %v84
    %94 = vmatpush.msra.mxu0 %v83
    %95 = vmatpush.msra.mxu0 %v82
    %96 = vmatpush.msra.mxu0 %v81
    %97 = vmatpush.msra.mxu0 %v80
    %98 = vmatpush.msra.mxu0 %v79
    %99 = vmatpush.msra.mxu0 %v78
    %100 = vmatpush.msra.mxu0 %v77
    %101 = vmatpush.msra.mxu0 %v76
    %102 = vmatpush.msra.mxu0 %v75
    %103 = vmatpush.msra.mxu0 %v74
    %104 = vmatpush.msra.mxu0 %v73
    %105 = vmatmul.f32.gmra.mxu0 %v72
    %v106 = vpop.f32.mrf.mxu0
    %v107 = vadd.f32 0.0, %v106
    %108 = vdwg.mxu0
    %v109 = vrot.slane %v107, 4
    %v110 = vadd.f32 %v107, %v109
    %v111 = vrot.slane %v110, 2
    %v112 = vadd.f32 %v110, %v111
    %v113 = vrot.slane %v112, 1
    %v114 = vadd.f32 %v112, %v113
    %v115 = vmul.f32 %v107, %v107
    %v116 = vrot.slane %v115, 4
    %v117 = vadd.f32 %v115, %v116
    %v118 = vrot.slane %v117, 2
    %v119 = vadd.f32 %v117, %v118
    %v120 = vrot.slane %v119, 1
    %v121 = vadd.f32 %v119, %v120
    %v122 = vld [vmem:[%s2] sm:$0x1]
    %v123 = vld [vmem:[%s3] sm:$0x1]
    %v124 = vmul.f32 %v114, 0.125
    %v125 = vmul.f32 %v121, 0.125
    %v126 = vmul.f32 %v124, %v124
    %v127 = vsub.f32 %v125, %v126
    %v128 = vmax.f32 %v127, 0.0
    %v129 = vadd.f32 %v128, 1e-05
    %v130 = vrsqrt.pop %v129
    %v131 = vmul.f32 %v130, %v129
    %v132 = vmul.f32 %v131, %v130
    %v133 = vmul.f32 0.5, %v132
    %v134 = vsub.f32 1.5, %v133
    %v135 = vmul.f32 %v130, %v134
    %vm136 = vweird.f32 %v129
    %vm137 = vweird.f32 %v130
    %vm138 = vmor %vm136, %vm137
    %v139 = vsel %vm138, %v130, %v135
    %v140 = vmul.f32 %v122, %v139
    %v141 = vmul.f32 %v124, %v140
    %v142 = vsub.f32 %v123, %v141
    %v144 = vperm.slane %v140, 0
    %v146 = vmul.f32 %v107, %v144
    %v148 = vperm.slane %v142, 0
    %v150 = vadd.f32 %v146, %v148
    %v151 = vmul.f32 %v150, 0.1
    %v152 = vmax.f32 %v150, %v151
    %v153 = vadd.f32 %v152, %v72
    %v154 = vld [vmem:[#allocation7] sm:$0xff]
    %v155 = vld [vmem:[#allocation7 + $0x8] sm:$0xff]
    %v156 = vld [vmem:[#allocation7 + $0x10] sm:$0xff]
    %v157 = vld [vmem:[#allocation7 + $0x18] sm:$0xff]
    %v158 = vld [vmem:[#allocation7 + $0x20] sm:$0xff]
    %v159 = vld [vmem:[#allocation7 + $0x28] sm:$0xff]
    %v160 = vld [vmem:[#allocation7 + $0x30] sm:$0xff]
    %v161 = vld [vmem:[#allocation7 + $0x38] sm:$0xff]
    %v162 = vld [vmem:[#allocation7 + $0x40] sm:$0xff]
    %v163 = vld [vmem:[#allocation7 + $0x48] sm:$0xff]
    %v164 = vld [vmem:[#allocation7 + $0x50] sm:$0xff]
    %v165 = vld [vmem:[#allocation7 + $0x58] sm:$0xff]
    %v166 = vld [vmem:[#allocation7 + $0x60] sm:$0xff]
    %v167 = vld [vmem:[#allocation7 + $0x68] sm:$0xff]
    %v168 = vld [vmem:[#allocation7 + $0x70] sm:$0xff]
    %v169 = vld [vmem:[#allocation7 + $0x78] sm:$0xff]
    %170 = vmatpush.msra.mxu0 %v169
    %171 = vmatpush.msra.mxu0 %v168
    %172 = vmatpush.msra.mxu0 %v167
    %173 = vmatpush.msra.mxu0 %v166
    %174 = vmatpush.msra.mxu0 %v165
    %175 = vmatpush.msra.mxu0 %v164
    %176 = vmatpush.msra.mxu0 %v163
    %177 = vmatpush.msra.mxu0 %v162
    %178 = vmatpush.msra.mxu0 %v161
    %179 = vmatpush.msra.mxu0 %v160
    %180 = vmatpush.msra.mxu0 %v159
    %181 = vmatpush.msra.mxu0 %v158
    %182 = vmatpush.msra.mxu0 %v157
    %183 = vmatpush.msra.mxu0 %v156
    %184 = vmatpush.msra.mxu0 %v155
    %185 = vmatpush.msra.mxu0 %v154
    %186 = vmatmul.f32.gmra.mxu0 %v153
    %v187 = vpop.f32.mrf.mxu0
    %v188 = vadd.f32 0.0, %v187
    %189 = vdwg.mxu0
    %v190 = vrot.slane %v188, 4
    %v191 = vadd.f32 %v188, %v190
    %v192 = vrot.slane %v191, 2
    %v193 = vadd.f32 %v191, %v192
    %v194 = vrot.slane %v193, 1
    %v195 = vadd.f32 %v193, %v194
    %v196 = vmul.f32 %v188, %v188
    %v197 = vrot.slane %v196, 4
    %v198 = vadd.f32 %v196, %v197
    %v199 = vrot.slane %v198, 2
    %v200 = vadd.f32 %v198, %v199
    %v201 = vrot.slane %v200, 1
    %v202 = vadd.f32 %v200, %v201
    %v203 = vld [vmem:[%s5] sm:$0x1]
    %v204 = vld [vmem:[%s6] sm:$0x1]
    %v205 = vmul.f32 %v195, 0.125
    %v206 = vmul.f32 %v202, 0.125
    %v207 = vmul.f32 %v205, %v205
    %v208 = vsub.f32 %v206, %v207
    %v209 = vmax.f32 %v208, 0.0
    %v210 = vadd.f32 %v209, 1e-05
    %v211 = vrsqrt.pop %v210
    %v212 = vmul.f32 %v211, %v210
    %v213 = vmul.f32 %v212, %v211
    %v214 = vmul.f32 0.5, %v213
    %v215 = vsub.f32 1.5, %v214
    %v216 = vmul.f32 %v211, %v215
    %vm217 = vweird.f32 %v210
    %vm218 = vweird.f32 %v211
    %vm219 = vmor %vm217, %vm218
    %v220 = vsel %vm219, %v211, %v216
    %v221 = vmul.f32 %v203, %v220
    %v222 = vmul.f32 %v205, %v221
    %v223 = vsub.f32 %v204, %v222
    %v225 = vperm.slane %v221, 0
    %v227 = vmul.f32 %v188, %v225
    %v229 = vperm.slane %v223, 0
    %v231 = vadd.f32 %v227, %v229
    %v232 = vtanh.pop %v231
    %v233 = vadd.f32 %v232, %v153
    %234 = vst [vmem:[#allocation8] sm:$0xff] %v233
    // Predicated region
    $region42: #{_generator_fused.1} parent=1 // pred_check
      _
    $region43: #{_generator_fused.1} parent=1 // pred_check_branch
      %236 = sbr.rel (0) target = $region45
    $region44: #{_generator_fused.1} parent=1 // pred_region
      %238 = vsyncadd [#allocation4], 0
      %s240 = sshll.u32 [#allocation8], 4
      %s241 = int_to_ptr.vmem [resolvable:$true] %s240
      %s242 = sshll.u32 %s7, 4
      %s243 = int_to_ptr.hbm [resolvable:$true] %s242
      %245 = dma.vmem_to_hbm [thread:$0]  %s241, 128, %s243, [#allocation4]
    $region45: #{_generator_fused.1} parent=1 // pred_fallthru
      _
    // Predicated region
    $region46: #{_generator_fused.1} parent=1 // pred_check
      _
    $region47: #{_generator_fused.1} parent=1 // pred_check_branch
      %247 = sbr.rel (0) target = $region49
    $region48: #{_generator_fused.1} parent=1 // pred_region
      %249 = dma.done [#allocation4], 128
    $region49: #{_generator_fused.1} parent=1 // pred_fallthru
      _
    %250 = vsyncpa [#allocation3], 1
    %251 = vsyncpa [#allocation6], 1
    %252 = vsyncpa [#allocation4], 1

</llo_original>
